<compile_context>
chip_gen: v6e
topology: v6e:2x2x1
jax: 0.10.0
libtpu: 0.0.40
codegen_flags: <defaults>
</compile_context>

<pallas_src>
import jax
import jax.numpy as jnp
from jax.experimental import pallas as pl
from jax.experimental.pallas import tpu as pltpu

BN_EPS = 1e-5
MATMUL_DTYPE = jnp.bfloat16  # set to jnp.float32 for exact f32 parity with PyTorch
_LANE = 128


def _round_up(n, m):
    return ((n + m - 1) // m) * m


# --------------------------------------------------------------------------------------
# Kernel: one grid step == one full encoder pass over one stacked input
# --------------------------------------------------------------------------------------
def _encoder_kernel(x_ref, w1_ref, g_ref, be_ref, w2_ref, b2_ref, o_ref):
    # x_ref: (1, N, Dp) f32 ; w1: (Dp, Hp) bf16 ; g, be: (1, Hp) f32 ;
    # w2: (Hp, Kp) bf16 ; b2: (1, Kp) f32 ; o_ref: (1, N, Kp) f32.
    x = x_ref[0].astype(w1_ref.dtype)

    # Linear 1 (MXU, bf16 operands, f32 accumulate).  The Linear bias is omitted:
    # training-mode BatchNorm subtracts the batch mean right after, so a per-feature
    # bias is mathematically cancelled.
    h = jnp.dot(x, w1_ref[...], preferred_element_type=jnp.float32)

    # BatchNorm1d, training-mode batch statistics, one-pass mean/var.  f32 VPU/EUP math.
    n_inv = jnp.float32(1.0 / h.shape[0])
    mean = jnp.sum(h, axis=0, keepdims=True) * n_inv
    mean_sq = jnp.sum(h * h, axis=0, keepdims=True) * n_inv
    var = jnp.maximum(mean_sq - mean * mean, 0.0)
    hn = (h - mean) * jax.lax.rsqrt(var + BN_EPS) * g_ref[...] + be_ref[...]

    # ReLU
    r = jnp.maximum(hn, 0.0)

    # Linear 2 (MXU) + Tanh (f32)
    o = jnp.tanh(
        jnp.dot(r.astype(w2_ref.dtype), w2_ref[...], preferred_element_type=jnp.float32)
        + b2_ref[...]
    )
    o_ref[0] = o.astype(o_ref.dtype)


# --------------------------------------------------------------------------------------
# Parameter handling
# --------------------------------------------------------------------------------------
def init_duch_params(key, image_dim, text_dim, hidden_dim, hash_dim):
    """Deterministic synthetic parameters (same shapes as the PyTorch module)."""
    def branch(k, in_dim):
        k1, k2, k3, k4, k5, k6 = jax.random.split(k, 6)
        w1 = jax.random.normal(k1, (in_dim, hidden_dim), jnp.float32) * 0.05
        b1 = jax.random.normal(k2, (1, hidden_dim), jnp.float32) * 0.05
        gamma = 1.0 + jax.random.normal(k3, (1, hidden_dim), jnp.float32) * 0.02
        beta = jax.random.normal(k4, (1, hidden_dim), jnp.float32) * 0.02
        w2 = jax.random.normal(k5, (hidden_dim, hash_dim), jnp.float32) * 0.05
        b2 = jax.random.normal(k6, (1, hash_dim), jnp.float32) * 0.05
        return (w1, b1, gamma, beta, w2, b2)

    ki, kt = jax.random.split(key, 2)
    return {
        "image_module": branch(ki, image_dim),
        "text_module": branch(kt, text_dim),
        # TODO(synk): hash_dis discriminator head is defined in __init__ but unused in
        # forward(); not translated to a kernel here.
    }


def prepare_encoder_params(raw_params):
    """Pad feature dims to the 128-lane width, drop the BN-cancelled Linear bias and
    cast matmul weights to MATMUL_DTYPE.  Call once; reuse for every forward."""
    w1, b1, gamma, beta, w2, b2 = raw_params
    del b1  # cancelled by training-mode BatchNorm (mean subtraction)
    d_in, hidden = w1.shape
    hash_dim = w2.shape[1]
    dp, hp, kp = (_round_up(d, _LANE) for d in (d_in, hidden, hash_dim))

    def pad2(a, rows, cols, dtype):
        out = jnp.zeros((rows, cols), dtype)
        return out.at[: a.shape[0], : a.shape[1]].set(a.astype(dtype))

    return {
        "w1": pad2(w1, dp, hp, MATMUL_DTYPE),
        "gamma": pad2(gamma, 1, hp, jnp.float32),
        "beta": pad2(beta, 1, hp, jnp.float32),
        "w2": pad2(w2, hp, kp, MATMUL_DTYPE),
        "b2": pad2(b2, 1, kp, jnp.float32),
        "d_in": d_in,
        "hash_dim": hash_dim,
    }


# --------------------------------------------------------------------------------------
# Wrapper: one pallas_call per branch, grid over the stacked same-branch inputs
# --------------------------------------------------------------------------------------
def _encoder_multi(xs, p):
    """Run one DUCH branch on a list of same-shaped inputs with ONE pallas_call.
    BatchNorm statistics are computed per grid step (per original input), matching
    separate PyTorch module invocations."""
    s = len(xs)
    n, d_in = xs[0].shape
    assert d_in == p["d_in"]
    dp, hp = p["w1"].shape
    kp = p["w2"].shape[1]

    x = jnp.stack(xs, axis=0)
    if dp != d_in:
        x = jnp.pad(x, ((0, 0), (0, 0), (0, dp - d_in)))

    out = pl.pallas_call(
        _encoder_kernel,
        out_shape=jax.ShapeDtypeStruct((s, n, kp), jnp.float32),
        grid=(s,),
        in_specs=[
            pl.BlockSpec((1, n, dp), lambda i: (i, 0, 0)),  # per-input activation tile
            pl.BlockSpec((dp, hp), lambda i: (0, 0)),       # weights stay VMEM-resident
            pl.BlockSpec((1, hp), lambda i: (0, 0)),
            pl.BlockSpec((1, hp), lambda i: (0, 0)),
            pl.BlockSpec((hp, kp), lambda i: (0, 0)),
            pl.BlockSpec((1, kp), lambda i: (0, 0)),
        ],
        out_specs=pl.BlockSpec((1, n, kp), lambda i: (i, 0, 0)),
        compiler_params=pltpu.CompilerParams(dimension_semantics=("parallel",)),
    )(x, p["w1"], p["gamma"], p["beta"], p["w2"], p["b2"])

    out = out[:, :, : p["hash_dim"]]  # strip lane padding
    return [out[i] for i in range(s)]


def duch_forward(params, *args):
    """Mirrors DUCH.forward dispatch on 2 / 3 / 4 arguments (2 pallas_calls max)."""
    img_p, txt_p = params["image_module"], params["text_module"]
    if len(args) == 4:
        r_img1, r_img2, r_txt1, r_txt2 = args
        h_img1, h_img2 = _encoder_multi([r_img1, r_img2], img_p)
        h_txt1, h_txt2 = _encoder_multi([r_txt1, r_txt2], txt_p)
        return tuple(jnp.squeeze(h) for h in (h_img1, h_img2, h_txt1, h_txt2))
    elif len(args) == 3:
        r_img, r_txt1, r_txt2 = args
        (h_img,) = _encoder_multi([r_img], img_p)
        h_txt1, h_txt2 = _encoder_multi([r_txt1, r_txt2], txt_p)
        return tuple(jnp.squeeze(h) for h in (h_img, h_txt1, h_txt2))
    elif len(args) == 2:
        r_img, r_txt = args
        (h_img,) = _encoder_multi([r_img], img_p)
        (h_txt,) = _encoder_multi([r_txt], txt_p)
        return (h_img, h_txt)  # forward_img_txt does not squeeze
    else:
        raise Exception("Method must take 2, 3 or 4 arguments")


# --------------------------------------------------------------------------------------
# Pure-JAX references for correctness checks
# --------------------------------------------------------------------------------------
def _ref_encoder_f32(x, raw_params):
    """Faithful f32 PyTorch math (includes the Linear bias; BN cancels it)."""
    w1, b1, gamma, beta, w2, b2 = raw_params
    h = x @ w1 + b1
    mean = h.mean(axis=0, keepdims=True)
    var = ((h - mean) ** 2).mean(axis=0, keepdims=True)
    hn = (h - mean) / jnp.sqrt(var + BN_EPS) * gamma + beta
    r = jnp.maximum(hn, 0.0)
    return jnp.tanh(r @ w2 + b2)


def _ref_encoder_kernel_math(x, raw_params):
    """Mirrors the kernel math exactly (no b1, MATMUL_DTYPE matmuls, one-pass var)."""
    w1, _b1, gamma, beta, w2, b2 = raw_params
    h = jnp.dot(x.astype(MATMUL_DTYPE), w1.astype(MATMUL_DTYPE),
                preferred_element_type=jnp.float32)
    n_inv = jnp.float32(1.0 / h.shape[0])
    mean = jnp.sum(h, axis=0, keepdims=True) * n_inv
    var = jnp.maximum(jnp.sum(h * h, axis=0, keepdims=True) * n_inv - mean * mean, 0.0)
    hn = (h - mean) * jax.lax.rsqrt(var + BN_EPS) * gamma + beta
    r = jnp.maximum(hn, 0.0)
    o = jnp.dot(r.astype(MATMUL_DTYPE), w2.astype(MATMUL_DTYPE),
                preferred_element_type=jnp.float32) + b2
    return jnp.tanh(o)


if __name__ == "__main__":
    batch = 8
    image_dim, text_dim, hidden_dim, hash_dim = 32, 24, 32, 16

    key = jax.random.PRNGKey(0)
    kparam, k1, k2, k3, k4 = jax.random.split(key, 5)
    raw = init_duch_params(kparam, image_dim, text_dim, hidden_dim, hash_dim)
    params = {name: prepare_encoder_params(raw[name])
              for name in ("image_module", "text_module")}

    r_img1 = jax.random.normal(k1, (batch, image_dim), jnp.float32)
    r_img2 = jax.random.normal(k2, (batch, image_dim), jnp.float32)
    r_txt1 = jax.random.normal(k3, (batch, text_dim), jnp.float32)
    r_txt2 = jax.random.normal(k4, (batch, text_dim), jnp.float32)

    # 4-arg path (forward_img_img_txt_txt): exactly TWO pallas_call launches.
    outs = jax.block_until_ready(duch_forward(params, r_img1, r_img2, r_txt1, r_txt2))

    inputs = (r_img1, r_img2, r_txt1, r_txt2)
    branches = ("image_module", "image_module", "text_module", "text_module")
    for o, x, b in zip(outs, inputs, branches):
        assert o.shape == (batch, hash_dim)
        mirror = _ref_encoder_kernel_math(x, raw[b])
        assert jnp.max(jnp.abs(o - mirror)) < 5e-4, "kernel != mirrored reference"
        full = _ref_encoder_f32(x, raw[b])
        assert jnp.max(jnp.abs(o - full)) < 5e-2, "kernel drifted from f32 module math"

    # 3-arg and 2-arg dispatch paths.
    h_img, h_t1, h_t2 = jax.block_until_ready(duch_forward(params, r_img1, r_txt1, r_txt2))
    assert h_img.shape == (batch, hash_dim) and h_t1.shape == (batch, hash_dim)
    h_i, h_t = jax.block_until_ready(duch_forward(params, r_img1, r_txt1))
    assert h_i.shape == (batch, hash_dim) and h_t.shape == (batch, hash_dim)

    print("KERNEL_OK")
</pallas_src>

<mosaic_0001>
module attributes {stable_mosaic.version = 11 : i64} {
  func.func @_encoder_kernel(%arg0: i32, %arg1: memref<1x8x128xf32, #tpu.memory_space<vmem>>, %arg2: memref<128x128xbf16, #tpu.memory_space<vmem>>, %arg3: memref<1x128xf32, #tpu.memory_space<vmem>>, %arg4: memref<1x128xf32, #tpu.memory_space<vmem>>, %arg5: memref<128x128xbf16, #tpu.memory_space<vmem>>, %arg6: memref<1x128xf32, #tpu.memory_space<vmem>>, %arg7: memref<1x8x128xf32, #tpu.memory_space<vmem>>) attributes {dimension_semantics = [#tpu.dimension_semantics<parallel>], iteration_bounds = array<i64: 2>, scalar_prefetch = 0 : i64, scratch_operands = 0 : i64, tpu.core_type = #tpu.core_type<tc>, window_params = [{transform_indices = @transform_0, window_bounds = array<i64: 1, 8, 128>}, {pipeline_mode = #tpu.pipeline_mode<synchronous>, transform_indices = @transform_1, window_bounds = array<i64: 128, 128>}, {pipeline_mode = #tpu.pipeline_mode<synchronous>, transform_indices = @transform_2, window_bounds = array<i64: 1, 128>}, {pipeline_mode = #tpu.pipeline_mode<synchronous>, transform_indices = @transform_3, window_bounds = array<i64: 1, 128>}, {pipeline_mode = #tpu.pipeline_mode<synchronous>, transform_indices = @transform_4, window_bounds = array<i64: 128, 128>}, {pipeline_mode = #tpu.pipeline_mode<synchronous>, transform_indices = @transform_5, window_bounds = array<i64: 1, 128>}, {transform_indices = @transform_6, window_bounds = array<i64: 1, 8, 128>}]} {
    %c0 = arith.constant 0 : index
    %c0_0 = arith.constant 0 : index
    %c0_1 = arith.constant 0 : index
    %0 = vector.load %arg1[%c0, %c0_0, %c0_1] : memref<1x8x128xf32, #tpu.memory_space<vmem>>, vector<1x8x128xf32>
    %1 = vector.shape_cast %0 : vector<1x8x128xf32> to vector<8x128xf32>
    %2 = arith.truncf %1 : vector<8x128xf32> to vector<8x128xbf16>
    %c0_2 = arith.constant 0 : index
    %c0_3 = arith.constant 0 : index
    %3 = vector.load %arg2[%c0_2, %c0_3] : memref<128x128xbf16, #tpu.memory_space<vmem>>, vector<128x128xbf16>
    %cst = arith.constant dense<0.000000e+00> : vector<8x128xf32>
    %4 = tpu.matmul %2, %3, %cst {dimension_numbers = #tpu.dot_dimension_numbers<[1], [0], [0], [1], [0, 0, 1, 1], [], []>} : vector<8x128xbf16>, vector<128x128xbf16>, vector<8x128xf32> -> vector<8x128xf32>
    %cst_4 = arith.constant dense<0.000000e+00> : vector<128xf32>
    %5 = vector.multi_reduction <add>, %4, %cst_4 [0] : vector<8x128xf32> to vector<128xf32>
    %6 = vector.shape_cast %5 : vector<128xf32> to vector<1x128xf32>
    %cst_5 = arith.constant 1.250000e-01 : f32
    %7 = vector.broadcast %cst_5 : f32 to vector<1x128xf32>
    %8 = arith.mulf %6, %7 : vector<1x128xf32>
    %9 = arith.mulf %4, %4 : vector<8x128xf32>
    %cst_6 = arith.constant dense<0.000000e+00> : vector<128xf32>
    %10 = vector.multi_reduction <add>, %9, %cst_6 [0] : vector<8x128xf32> to vector<128xf32>
    %11 = vector.shape_cast %10 : vector<128xf32> to vector<1x128xf32>
    %cst_7 = arith.constant 1.250000e-01 : f32
    %12 = vector.broadcast %cst_7 : f32 to vector<1x128xf32>
    %13 = arith.mulf %11, %12 : vector<1x128xf32>
    %14 = arith.mulf %8, %8 : vector<1x128xf32>
    %15 = arith.subf %13, %14 : vector<1x128xf32>
    %cst_8 = arith.constant 0.000000e+00 : f32
    %16 = vector.broadcast %cst_8 : f32 to vector<1x128xf32>
    %17 = arith.maximumf %15, %16 : vector<1x128xf32>
    %18 = vector.broadcast %8 : vector<1x128xf32> to vector<8x128xf32>
    %19 = arith.subf %4, %18 : vector<8x128xf32>
    %cst_9 = arith.constant 9.99999974E-6 : f32
    %20 = vector.broadcast %cst_9 : f32 to vector<1x128xf32>
    %21 = arith.addf %17, %20 : vector<1x128xf32>
    %22 = math.rsqrt %21 : vector<1x128xf32>
    %23 = vector.broadcast %22 : vector<1x128xf32> to vector<8x128xf32>
    %24 = arith.mulf %19, %23 : vector<8x128xf32>
    %c0_10 = arith.constant 0 : index
    %c0_11 = arith.constant 0 : index
    %25 = vector.load %arg3[%c0_10, %c0_11] : memref<1x128xf32, #tpu.memory_space<vmem>>, vector<1x128xf32>
    %26 = vector.broadcast %25 : vector<1x128xf32> to vector<8x128xf32>
    %27 = arith.mulf %24, %26 : vector<8x128xf32>
    %c0_12 = arith.constant 0 : index
    %c0_13 = arith.constant 0 : index
    %28 = vector.load %arg4[%c0_12, %c0_13] : memref<1x128xf32, #tpu.memory_space<vmem>>, vector<1x128xf32>
    %29 = vector.broadcast %28 : vector<1x128xf32> to vector<8x128xf32>
    %30 = arith.addf %27, %29 : vector<8x128xf32>
    %cst_14 = arith.constant 0.000000e+00 : f32
    %31 = vector.broadcast %cst_14 : f32 to vector<8x128xf32>
    %32 = arith.maximumf %30, %31 : vector<8x128xf32>
    %33 = arith.truncf %32 : vector<8x128xf32> to vector<8x128xbf16>
    %c0_15 = arith.constant 0 : index
    %c0_16 = arith.constant 0 : index
    %34 = vector.load %arg5[%c0_15, %c0_16] : memref<128x128xbf16, #tpu.memory_space<vmem>>, vector<128x128xbf16>
    %cst_17 = arith.constant dense<0.000000e+00> : vector<8x128xf32>
    %35 = tpu.matmul %33, %34, %cst_17 {dimension_numbers = #tpu.dot_dimension_numbers<[1], [0], [0], [1], [0, 0, 1, 1], [], []>} : vector<8x128xbf16>, vector<128x128xbf16>, vector<8x128xf32> -> vector<8x128xf32>
    %c0_18 = arith.constant 0 : index
    %c0_19 = arith.constant 0 : index
    %36 = vector.load %arg6[%c0_18, %c0_19] : memref<1x128xf32, #tpu.memory_space<vmem>>, vector<1x128xf32>
    %37 = vector.broadcast %36 : vector<1x128xf32> to vector<8x128xf32>
    %38 = arith.addf %35, %37 : vector<8x128xf32>
    %39 = math.tanh %38 : vector<8x128xf32>
    %c0_20 = arith.constant 0 : index
    %c0_21 = arith.constant 0 : index
    %c0_22 = arith.constant 0 : index
    %40 = vector.load %arg7[%c0_20, %c0_21, %c0_22] : memref<1x8x128xf32, #tpu.memory_space<vmem>>, vector<1x8x128xf32>
    %41 = vector.shape_cast %40 : vector<1x8x128xf32> to vector<8x128xf32>
    %42 = vector.shape_cast %39 : vector<8x128xf32> to vector<1x8x128xf32>
    tpu.vector_store %arg7[%c0_20, %c0_21, %c0_22], %42 {strides = array<i32>} : memref<1x8x128xf32, #tpu.memory_space<vmem>>, vector<1x8x128xf32>,
    return
  }
  func.func @transform_0(%arg0: i32) -> (i32, i32, i32) {
    %c0_i32 = arith.constant 0 : i32
    %c0_i32_0 = arith.constant 0 : i32
    %c0_i32_1 = arith.constant 0 : i32
    return %arg0, %c0_i32, %c0_i32_0 : i32, i32, i32
  }
  func.func @transform_1(%arg0: i32) -> (i32, i32) {
    %c0_i32 = arith.constant 0 : i32
    %c0_i32_0 = arith.constant 0 : i32
    %c0_i32_1 = arith.constant 0 : i32
    return %c0_i32, %c0_i32_0 : i32, i32
  }
  func.func @transform_2(%arg0: i32) -> (i32, i32) {
    %c0_i32 = arith.constant 0 : i32
    %c0_i32_0 = arith.constant 0 : i32
    %c0_i32_1 = arith.constant 0 : i32
    return %c0_i32, %c0_i32_0 : i32, i32
  }
  func.func @transform_3(%arg0: i32) -> (i32, i32) {
    %c0_i32 = arith.constant 0 : i32
    %c0_i32_0 = arith.constant 0 : i32
    %c0_i32_1 = arith.constant 0 : i32
    return %c0_i32, %c0_i32_0 : i32, i32
  }
  func.func @transform_4(%arg0: i32) -> (i32, i32) {
    %c0_i32 = arith.constant 0 : i32
    %c0_i32_0 = arith.constant 0 : i32
    %c0_i32_1 = arith.constant 0 : i32
    return %c0_i32, %c0_i32_0 : i32, i32
  }
  func.func @transform_5(%arg0: i32) -> (i32, i32) {
    %c0_i32 = arith.constant 0 : i32
    %c0_i32_0 = arith.constant 0 : i32
    %c0_i32_1 = arith.constant 0 : i32
    return %c0_i32, %c0_i32_0 : i32, i32
  }
  func.func @transform_6(%arg0: i32) -> (i32, i32, i32) {
    %c0_i32 = arith.constant 0 : i32
    %c0_i32_0 = arith.constant 0 : i32
    %c0_i32_1 = arith.constant 0 : i32
    return %arg0, %c0_i32, %c0_i32_0 : i32, i32, i32
  }
}

</mosaic_0001>

<llo_original>
// kernel: tpu_custom_call.1
$region0: #{tpu_custom_call.1}
  #allocation0 [shape = 'u32[]', space=smem, size = 0x4, offset = 0x4, fixed_abs, tag = 'smem constant byte address 0x4 - core index']
  #allocation1 [shape = 'u32[144,128]{1,0:T(1,128)}', space=vmem, size = 0x12000, scoped, tag = 'internal scratch']
  %s0 = inlined_call_operand.hbm [shape: f32[2,8,128], index: 0, kind: input, shape index: {}]
  %s1 = inlined_call_operand.hbm [shape: bf16[128,128], index: 1, kind: input, shape index: {}]
  %s2 = inlined_call_operand.vmem [shape: f32[1,128], index: 2, kind: input, shape index: {}]
  %s3 = inlined_call_operand.vmem [shape: f32[1,128], index: 3, kind: input, shape index: {}]
  %s4 = inlined_call_operand.hbm [shape: bf16[128,128], index: 4, kind: input, shape index: {}]
  %s5 = inlined_call_operand.vmem [shape: f32[1,128], index: 5, kind: input, shape index: {}]
  %s6 = inlined_call_operand.hbm [shape: f32[2,8,128], index: 6, kind: output, shape index: {}]
  %s7 = sld [smem:[#allocation0]]
  $region69: #{tpu_custom_call.1} parent=0
    _
  %s9 = ssub.s32 1, %s7
  %s10 = scalar_select 0, %s9, %s7
  $region1: #{tpu_custom_call.1} parent=0
    #allocation2 [shape = 'u8[8192]{0}', space=vmem, size = 0x2000, scoped, tag = 'input window, operand 0']
    #allocation3 [shape = 's32[2]{0}', space=sflag, size = 0x8, scoped, tag = 'scoped memory for tpu_custom_call.1']
    #allocation4 [shape = 's32[2]{0}', space=sflag, size = 0x8, scoped, tag = 'scoped memory for tpu_custom_call.1']
    #allocation5 [shape = 'u8[32768]{0}', space=vmem, size = 0x8000, scoped, tag = 'input window, operand 1, single buffered']
    #allocation6 [shape = 's32[1]{0}', space=sflag, size = 0x4, scoped, tag = 'scoped memory for tpu_custom_call.1']
    #allocation7 [shape = 'u8[32768]{0}', space=vmem, size = 0x8000, scoped, tag = 'input window, operand 4, single buffered']
    #allocation8 [shape = 'u8[8192]{0}', space=vmem, size = 0x2000, scoped, tag = 'output window, operand 0']
    %11 = vsyncpa [#allocation3], 0
    %s12 = scalar_lea.sflag [#allocation3], 1
    %13 = vsyncpa %s12, 0
    %14 = vsyncpa [#allocation6], 0
    %15 = vsyncpa [#allocation4], 0
    %s16 = scalar_lea.sflag [#allocation4], 1
    %17 = vsyncpa %s16, 0
    loop: start=0, step=1, limit=4
    $region2: #{tpu_custom_call.1} parent=1 // loop_pre_header
      _
    $region3: #{tpu_custom_call.1} parent=1 // loop_header
      %s19 = sphi 0, %s23
      %p20 = scmp.ge.s32.totalorder %s19, 4
      %s29 = sphi 0, %s31
      %s32 = sphi 0, %s29
      %s33 = sphi 0, %s32
      %s49 = sphi 0, %s33
      %s53 = sphi 0, %s53
      %s55 = sphi 0, %s53
      %s56 = sphi 0, %s55
      %s70 = sphi 0, %s56
      %s74 = sphi 0, %s74
      %s76 = sphi 0, %s74
      %s77 = sphi 0, %s76
      %s91 = sphi 0, %s77
      %s95 = sphi 0, %s95
      %s97 = sphi 0, %s95
      %s98 = sphi 0, %s97
      %s112 = sphi 0, %s98
      %s116 = sphi 0, %s116
      %s118 = sphi 0, %s116
      %s119 = sphi 0, %s118
      %s133 = sphi 0, %s119
      %s137 = sphi 0, %s137
      %s139 = sphi 0, %s137
      %s140 = sphi 0, %s139
      %s154 = sphi 0, %s140
      %s160 = sphi 0, %s162
      %s163 = sphi 0, %s160
      %s164 = sphi 0, %s163
      %s180 = sphi 0, %s164
    $region4: #{tpu_custom_call.1} parent=1 // loop_header_branch
      %22 = sbr.rel (%p20) target = $region8
    $region5: #{tpu_custom_call.1} parent=1 // loop_body
      %s24 = ssub.s32 %s19, 1
      %s25 = ssub.s32 %s19, 2
      %s26 = sadd.s32 %s19, 1
      %s27 = ssub.s32 %s19, %s26
      %p28 = scmp.eq.s32.totalorder %s27, 0
      %s30 = sadd.s32 %s29, 1
      %s31 = scalar_select %p28, %s29, %s30
      %p34 = pneg %p28
      %p35 = scmp.eq.s32.totalorder %s19, 1
      %p36 = por %p34, %p35
      %p37 = scmp.ne.s32.totalorder %s29, %s32
      %p38 = scmp.eq.s32.totalorder %s19, 0
      %p39 = por %p37, %p38
      %p40 = scmp.ne.s32.totalorder %s29, %s32
      %p41 = scmp.eq.s32.totalorder %s24, 1
      %p42 = por %p40, %p41
      %p43 = scmp.ne.s32.totalorder %s32, %s33
      %p44 = scmp.eq.s32.totalorder %s24, 0
      %p45 = por %p43, %p44
      %p46 = scmp.ne.s32.totalorder %s32, %s33
      %p47 = scmp.eq.s32.totalorder %s25, 1
      %p48 = por %p46, %p47
      %p50 = scmp.ne.s32.totalorder %s33, %s49
      %p51 = scmp.eq.s32.totalorder %s25, 0
      %p52 = por %p50, %p51
      %s54 = sadd.s32 %s53, 1
      %p57 = scmp.eq.s32.totalorder %s19, 1
      %p58 = scmp.ne.s32.totalorder %s53, %s55
      %p59 = scmp.eq.s32.totalorder %s19, 0
      %p60 = por %p58, %p59
      %p61 = scmp.ne.s32.totalorder %s53, %s55
      %p62 = scmp.eq.s32.totalorder %s24, 1
      %p63 = por %p61, %p62
      %p64 = scmp.ne.s32.totalorder %s55, %s56
      %p65 = scmp.eq.s32.totalorder %s24, 0
      %p66 = por %p64, %p65
      %p67 = scmp.ne.s32.totalorder %s55, %s56
      %p68 = scmp.eq.s32.totalorder %s25, 1
      %p69 = por %p67, %p68
      %p71 = scmp.ne.s32.totalorder %s56, %s70
      %p72 = scmp.eq.s32.totalorder %s25, 0
      %p73 = por %p71, %p72
      %s75 = sadd.s32 %s74, 1
      %p78 = scmp.eq.s32.totalorder %s19, 1
      %p79 = scmp.ne.s32.totalorder %s74, %s76
      %p80 = scmp.eq.s32.totalorder %s19, 0
      %p81 = por %p79, %p80
      %p82 = scmp.ne.s32.totalorder %s74, %s76
      %p83 = scmp.eq.s32.totalorder %s24, 1
      %p84 = por %p82, %p83
      %p85 = scmp.ne.s32.totalorder %s76, %s77
      %p86 = scmp.eq.s32.totalorder %s24, 0
      %p87 = por %p85, %p86
      %p88 = scmp.ne.s32.totalorder %s76, %s77
      %p89 = scmp.eq.s32.totalorder %s25, 1
      %p90 = por %p88, %p89
      %p92 = scmp.ne.s32.totalorder %s77, %s91
      %p93 = scmp.eq.s32.totalorder %s25, 0
      %p94 = por %p92, %p93
      %s96 = sadd.s32 %s95, 1
      %p99 = scmp.eq.s32.totalorder %s19, 1
      %p100 = scmp.ne.s32.totalorder %s95, %s97
      %p101 = scmp.eq.s32.totalorder %s19, 0
      %p102 = por %p100, %p101
      %p103 = scmp.ne.s32.totalorder %s95, %s97
      %p104 = scmp.eq.s32.totalorder %s24, 1
      %p105 = por %p103, %p104
      %p106 = scmp.ne.s32.totalorder %s97, %s98
      %p107 = scmp.eq.s32.totalorder %s24, 0
      %p108 = por %p106, %p107
      %p109 = scmp.ne.s32.totalorder %s97, %s98
      %p110 = scmp.eq.s32.totalorder %s25, 1
      %p111 = por %p109, %p110
      %p113 = scmp.ne.s32.totalorder %s98, %s112
      %p114 = scmp.eq.s32.totalorder %s25, 0
      %p115 = por %p113, %p114
      %s117 = sadd.s32 %s116, 1
      %p120 = scmp.eq.s32.totalorder %s19, 1
      %p121 = scmp.ne.s32.totalorder %s116, %s118
      %p122 = scmp.eq.s32.totalorder %s19, 0
      %p123 = por %p121, %p122
      %p124 = scmp.ne.s32.totalorder %s116, %s118
      %p125 = scmp.eq.s32.totalorder %s24, 1
      %p126 = por %p124, %p125
      %p127 = scmp.ne.s32.totalorder %s118, %s119
      %p128 = scmp.eq.s32.totalorder %s24, 0
      %p129 = por %p127, %p128
      %p130 = scmp.ne.s32.totalorder %s118, %s119
      %p131 = scmp.eq.s32.totalorder %s25, 1
      %p132 = por %p130, %p131
      %p134 = scmp.ne.s32.totalorder %s119, %s133
      %p135 = scmp.eq.s32.totalorder %s25, 0
      %p136 = por %p134, %p135
      %s138 = sadd.s32 %s137, 1
      %p141 = scmp.eq.s32.totalorder %s19, 1
      %p142 = scmp.ne.s32.totalorder %s137, %s139
      %p143 = scmp.eq.s32.totalorder %s19, 0
      %p144 = por %p142, %p143
      %p145 = scmp.ne.s32.totalorder %s137, %s139
      %p146 = scmp.eq.s32.totalorder %s24, 1
      %p147 = por %p145, %p146
      %p148 = scmp.ne.s32.totalorder %s139, %s140
      %p149 = scmp.eq.s32.totalorder %s24, 0
      %p150 = por %p148, %p149
      %p151 = scmp.ne.s32.totalorder %s139, %s140
      %p152 = scmp.eq.s32.totalorder %s25, 1
      %p153 = por %p151, %p152
      %p155 = scmp.ne.s32.totalorder %s140, %s154
      %p156 = scmp.eq.s32.totalorder %s25, 0
      %p157 = por %p155, %p156
      %s158 = ssub.s32 %s19, %s26
      %p159 = scmp.eq.s32.totalorder %s158, 0
      %s161 = sadd.s32 %s160, 1
      %s162 = scalar_select %p159, %s160, %s161
      %p165 = pneg %p159
      %p166 = scmp.eq.s32.totalorder %s19, 1
      %p167 = por %p165, %p166
      %p168 = scmp.ne.s32.totalorder %s160, %s163
      %p169 = scmp.eq.s32.totalorder %s19, 0
      %p170 = por %p168, %p169
      %p171 = scmp.ne.s32.totalorder %s160, %s163
      %p172 = scmp.eq.s32.totalorder %s24, 1
      %p173 = por %p171, %p172
      %p174 = scmp.ne.s32.totalorder %s163, %s164
      %p175 = scmp.eq.s32.totalorder %s24, 0
      %p176 = por %p174, %p175
      %p177 = scmp.ne.s32.totalorder %s163, %s164
      %p178 = scmp.eq.s32.totalorder %s25, 1
      %p179 = por %p177, %p178
      %p181 = scmp.ne.s32.totalorder %s164, %s180
      %p182 = scmp.eq.s32.totalorder %s25, 0
      %p183 = por %p181, %p182
      %p184 = scmp.le.s32.totalorder 1, %s19
      %p185 = scmp.lt.s32.totalorder %s19, 3
      %p186 = pnand %p184, %p185
      %p187 = pneg %p186
      // Predicated region
      $region9: #{tpu_custom_call.1} parent=5 // pred_check
        _
      $region10: #{tpu_custom_call.1} parent=5 // pred_check_branch
        %189 = sbr.rel (%p186) target = $region12
      $region11: #{tpu_custom_call.1} parent=5 // pred_region
        %s190 = ssub.s32 %s19, 1
        // Predicated region
        $region13: #{tpu_custom_call.1} parent=11 // pred_check
          %p191 = pneg %p66
        $region14: #{tpu_custom_call.1} parent=11 // pred_check_branch
          %193 = sbr.rel (%p191) target = $region16
        $region15: #{tpu_custom_call.1} parent=11 // pred_region
          %s195 = ssub.s32 1024, 1024
          %196 = vsyncadd [#allocation6], %s195
          %s197 = sshll.u32 [#allocation5], 4
          %s198 = int_to_ptr.vmem [resolvable:$true] %s197
          %203 = dma.hbm_to_vmem [thread:$0]  %s1, 1024, %s198, [#allocation6], 64, 64, 4
        $region16: #{tpu_custom_call.1} parent=11 // pred_fallthru
          _
        // Predicated region
        $region17: #{tpu_custom_call.1} parent=11 // pred_check
          %p204 = pneg %p87
        $region18: #{tpu_custom_call.1} parent=11 // pred_check_branch
          %206 = sbr.rel (%p204) target = $region20
        $region19: #{tpu_custom_call.1} parent=11 // pred_region
          _
        $region20: #{tpu_custom_call.1} parent=11 // pred_fallthru
          _
        // Predicated region
        $region21: #{tpu_custom_call.1} parent=11 // pred_check
          %p207 = pneg %p108
        $region22: #{tpu_custom_call.1} parent=11 // pred_check_branch
          %209 = sbr.rel (%p207) target = $region24
        $region23: #{tpu_custom_call.1} parent=11 // pred_region
          _
        $region24: #{tpu_custom_call.1} parent=11 // pred_fallthru
          _
        // Predicated region
        $region25: #{tpu_custom_call.1} parent=11 // pred_check
          %p210 = pneg %p129
        $region26: #{tpu_custom_call.1} parent=11 // pred_check_branch
          %212 = sbr.rel (%p210) target = $region28
        $region27: #{tpu_custom_call.1} parent=11 // pred_region
          %s214 = ssub.s32 1024, 1024
          %215 = vsyncadd [#allocation6], %s214
          %s216 = sshll.u32 [#allocation7], 4
          %s217 = int_to_ptr.vmem [resolvable:$true] %s216
          %222 = dma.hbm_to_vmem [thread:$0]  %s4, 1024, %s217, [#allocation6], 64, 64, 4
        $region28: #{tpu_custom_call.1} parent=11 // pred_fallthru
          _
        // Predicated region
        $region29: #{tpu_custom_call.1} parent=11 // pred_check
          %p223 = pneg %p150
        $region30: #{tpu_custom_call.1} parent=11 // pred_check_branch
          %225 = sbr.rel (%p223) target = $region32
        $region31: #{tpu_custom_call.1} parent=11 // pred_region
          _
        $region32: #{tpu_custom_call.1} parent=11 // pred_fallthru
          _
      $region12: #{tpu_custom_call.1} parent=5 // pred_fallthru
        _
      %p226 = scmp.lt.s32.totalorder %s19, 2
      // Predicated region
      $region33: #{tpu_custom_call.1} parent=5 // pred_check
        %p227 = pneg %p226
      $region34: #{tpu_custom_call.1} parent=5 // pred_check_branch
        %229 = sbr.rel (%p227) target = $region36
      $region35: #{tpu_custom_call.1} parent=5 // pred_region
        // Predicated region
        $region37: #{tpu_custom_call.1} parent=35 // pred_check
          %p230 = pneg %p39
        $region38: #{tpu_custom_call.1} parent=35 // pred_check_branch
          %232 = sbr.rel (%p230) target = $region40
        $region39: #{tpu_custom_call.1} parent=35 // pred_region
          %s233 = sand.u32 %s29, 1
          %s234 = scalar_lea.sflag [#allocation3], %s233
          %s235 = sand.u32 %s29, 1
          %s236 = smul.addr %s235, 8
          %s237 = scalar_lea.vmem [#allocation2], %s236
          %s239 = ssub.s32 128, 128
          %240 = vsyncadd %s234, %s239
          %s241 = smul.addr %s19, 128
          %s242 = scalar_lea.hbm %s0, %s241
          %s244 = sshll.u32 %s237, 4
          %s245 = int_to_ptr.vmem [resolvable:$true] %s244
          %247 = dma.hbm_to_vmem [thread:$0]  %s242, 128, %s245, %s234
        $region40: #{tpu_custom_call.1} parent=35 // pred_fallthru
          _
      $region36: #{tpu_custom_call.1} parent=5 // pred_fallthru
        _
      %p248 = scmp.le.s32.totalorder 1, %s19
      %p249 = scmp.lt.s32.totalorder %s19, 3
      %p250 = pnand %p248, %p249
      %p251 = pneg %p250
      // Predicated region
      $region41: #{tpu_custom_call.1} parent=5 // pred_check
        _
      $region42: #{tpu_custom_call.1} parent=5 // pred_check_branch
        %253 = sbr.rel (%p250) target = $region44
      $region43: #{tpu_custom_call.1} parent=5 // pred_region
        %s254 = ssub.s32 %s19, 1
        %s255 = sand.u32 %s32, 1
        %s256 = scalar_lea.sflag [#allocation3], %s255
        %s257 = sand.u32 %s32, 1
        %s258 = smul.addr %s257, 8
        %s259 = scalar_lea.vmem [#allocation2], %s258
        // Predicated region
        $region45: #{tpu_custom_call.1} parent=43 // pred_check
          %p260 = pneg %p45
        $region46: #{tpu_custom_call.1} parent=43 // pred_check_branch
          %262 = sbr.rel (%p260) target = $region48
        $region47: #{tpu_custom_call.1} parent=43 // pred_region
          %263 = dma.done %s256, 128
        $region48: #{tpu_custom_call.1} parent=43 // pred_fallthru
          _
        // Predicated region
        $region49: #{tpu_custom_call.1} parent=43 // pred_check
          %p264 = pneg %p66
        $region50: #{tpu_custom_call.1} parent=43 // pred_check_branch
          %266 = sbr.rel (%p264) target = $region52
        $region51: #{tpu_custom_call.1} parent=43 // pred_region
          %267 = dma.done [#allocation6], 1024
        $region52: #{tpu_custom_call.1} parent=43 // pred_fallthru
          _
        // Predicated region
        $region53: #{tpu_custom_call.1} parent=43 // pred_check
          %p268 = pneg %p129
        $region54: #{tpu_custom_call.1} parent=43 // pred_check_branch
          %270 = sbr.rel (%p268) target = $region56
        $region55: #{tpu_custom_call.1} parent=43 // pred_region
          %271 = dma.done [#allocation6], 1024
        $region56: #{tpu_custom_call.1} parent=43 // pred_fallthru
          _
        %s272 = sand.u32 %s32, 1
        %s273 = scalar_lea.sflag [#allocation3], %s272
        %s274 = sand.u32 %s32, 1
        %s275 = smul.addr %s274, 8
        %s276 = scalar_lea.vmem [#allocation2], %s275
        %p277 = pneg %p45
        %p278 = pneg %p42
        %p279 = pneg %p66
        %p280 = pneg %p63
        %p281 = pneg %p87
        %p282 = pneg %p84
        %p283 = pneg %p108
        %p284 = pneg %p105
        %p285 = pneg %p129
        %p286 = pneg %p126
        %p287 = pneg %p150
        %p288 = pneg %p147
        %p289 = pneg %p176
        %p290 = pneg %p173
        %s291 = sand.u32 %s163, 1
        %s292 = scalar_lea.sflag [#allocation4], %s291
        %s293 = sand.u32 %s163, 1
        %s294 = smul.addr %s293, 8
        %s295 = scalar_lea.vmem [#allocation8], %s294
        %v297 = vld [vmem:[%s259] sm:$0xff]
        %v298 = vpack.c.bf16 %v297, %v297
        %v299 = vld [vmem:[#allocation5] sm:$0xf]
        %v300 = vld [vmem:[#allocation5 + $0x4] sm:$0xf]
        %v301 = vld [vmem:[#allocation5 + $0x8] sm:$0xf]
        %v302 = vld [vmem:[#allocation5 + $0xc] sm:$0xf]
        %v303 = vld [vmem:[#allocation5 + $0x10] sm:$0xf]
        %v304 = vld [vmem:[#allocation5 + $0x14] sm:$0xf]
        %v305 = vld [vmem:[#allocation5 + $0x18] sm:$0xf]
        %v306 = vld [vmem:[#allocation5 + $0x1c] sm:$0xf]
        %v307 = vld [vmem:[#allocation5 + $0x20] sm:$0xf]
        %v308 = vld [vmem:[#allocation5 + $0x24] sm:$0xf]
        %v309 = vld [vmem:[#allocation5 + $0x28] sm:$0xf]
        %v310 = vld [vmem:[#allocation5 + $0x2c] sm:$0xf]
        %v311 = vld [vmem:[#allocation5 + $0x30] sm:$0xf]
        %v312 = vld [vmem:[#allocation5 + $0x34] sm:$0xf]
        %v313 = vld [vmem:[#allocation5 + $0x38] sm:$0xf]
        %v314 = vld [vmem:[#allocation5 + $0x3c] sm:$0xf]
        %v331 = vunpack.c.l.b16 %v299
        %v332 = vunpack.c.l.b16 %v300
        %v333 = vunpack.c.l.b16 %v301
        %v334 = vunpack.c.l.b16 %v302
        %v335 = vunpack.c.l.b16 %v303
        %v336 = vunpack.c.l.b16 %v304
        %v337 = vunpack.c.l.b16 %v305
        %v338 = vunpack.c.l.b16 %v306
        %v339 = vunpack.c.l.b16 %v307
        %v340 = vunpack.c.l.b16 %v308
        %v341 = vunpack.c.l.b16 %v309
        %v342 = vunpack.c.l.b16 %v310
        %v343 = vunpack.c.l.b16 %v311
        %v344 = vunpack.c.l.b16 %v312
        %v345 = vunpack.c.l.b16 %v313
        %v346 = vunpack.c.l.b16 %v314
        %v347 = vpack.c.b16 %v332, %v331
        %v348 = vpack.c.b16 %v334, %v333
        %v349 = vpack.c.b16 %v336, %v335
        %v350 = vpack.c.b16 %v338, %v337
        %v351 = vpack.c.b16 %v340, %v339
        %v352 = vpack.c.b16 %v342, %v341
        %v353 = vpack.c.b16 %v344, %v343
        %v354 = vpack.c.b16 %v346, %v345
        %363 = vmatprep.subr.bf16.mxu0 0
        %364 = vmatpush1.bf16.msra.mxu0 %v354
        %365 = vmatprep.subr.bf16.mxu0 0
        %366 = vmatpush1.bf16.msra.mxu0 %v353
        %367 = vmatprep.subr.bf16.mxu0 0
        %368 = vmatpush1.bf16.msra.mxu0 %v352
        %369 = vmatprep.subr.bf16.mxu0 0
        %370 = vmatpush1.bf16.msra.mxu0 %v351
        %371 = vmatprep.subr.bf16.mxu0 0
        %372 = vmatpush1.bf16.msra.mxu0 %v350
        %373 = vmatprep.subr.bf16.mxu0 0
        %374 = vmatpush1.bf16.msra.mxu0 %v349
        %375 = vmatprep.subr.bf16.mxu0 0
        %376 = vmatpush1.bf16.msra.mxu0 %v348
        %377 = vmatprep.subr.bf16.mxu0 0
        %378 = vmatpush1.bf16.msra.mxu0 %v347
        %379 = vmatprep.subr.bf16.mxu0 0
        %380 = vmatpush2.bf16.msra.mxu0 0
        %381 = vmatprep.subr.bf16.mxu0 0
        %382 = vmatpush2.bf16.msra.mxu0 0
        %383 = vmatprep.subr.bf16.mxu0 0
        %384 = vmatpush2.bf16.msra.mxu0 0
        %385 = vmatprep.subr.bf16.mxu0 0
        %386 = vmatpush2.bf16.msra.mxu0 0
        %387 = vmatprep.subr.bf16.mxu0 0
        %388 = vmatpush2.bf16.msra.mxu0 0
        %389 = vmatprep.subr.bf16.mxu0 0
        %390 = vmatpush2.bf16.msra.mxu0 0
        %391 = vmatprep.subr.bf16.mxu0 0
        %392 = vmatpush2.bf16.msra.mxu0 0
        %393 = vmatprep.subr.bf16.mxu0 0
        %394 = vmatpush2.bf16.msra.mxu0 0
        %395 = vmatprep.mubr.bf16.mxu0 0
        %396 = vmatmul.mubr.bf16.gmra.mxu0 %v298
        %v397 = vpop.f32.mrf.mxu0
        %v398 = vadd.f32 0.0, %v397
        %v399 = vpop.f32.mrf.mxu0
        %v400 = vpop.f32.mrf.mxu0
        %v401 = vpop.f32.mrf.mxu0
        %402 = vdwg.mxu0
        %v403 = vrot.slane %v398, 4
        %v404 = vadd.f32 %v398, %v403
        %v405 = vrot.slane %v404, 2
        %v406 = vadd.f32 %v404, %v405
        %v407 = vrot.slane %v406, 1
        %v408 = vadd.f32 %v406, %v407
        %v409 = vmul.f32 %v408, 0.125
        %v410 = vmul.f32 %v398, %v398
        %v411 = vrot.slane %v410, 4
        %v412 = vadd.f32 %v410, %v411
        %v413 = vrot.slane %v412, 2
        %v414 = vadd.f32 %v412, %v413
        %v415 = vrot.slane %v414, 1
        %v416 = vadd.f32 %v414, %v415
        %v417 = vmul.f32 %v416, 0.125
        %v418 = vmul.f32 %v409, %v409
        %v419 = vsub.f32 %v417, %v418
        %v420 = vmax.f32 %v419, 0.0
        %v421 = vsub.f32 %v398, %v409
        %v422 = vadd.f32 %v420, 1e-05
        %v423 = vrsqrt.pop %v422
        %v424 = vmul.f32 %v421, %v423
        %v425 = vld [vmem:[%s2] sm:$0x1]
        %v427 = vlaneseq
        %v428 = vshrl.u32 %v427, 7
        %v429 = vsub.s32 0, %v428
        %v430 = vrot.slane %v425, %v429
        %v432 = vmul.f32 %v424, %v430
        %v433 = vld [vmem:[%s3] sm:$0x1]
        %v435 = vlaneseq
        %v436 = vshrl.u32 %v435, 7
        %v437 = vsub.s32 0, %v436
        %v438 = vrot.slane %v433, %v437
        %v440 = vadd.f32 %v432, %v438
        %v441 = vmax.f32 %v440, 0.0
        %v442 = vpack.c.bf16 %v441, %v441
        %v443 = vld [vmem:[#allocation7] sm:$0xf]
        %v444 = vld [vmem:[#allocation7 + $0x4] sm:$0xf]
        %v445 = vld [vmem:[#allocation7 + $0x8] sm:$0xf]
        %v446 = vld [vmem:[#allocation7 + $0xc] sm:$0xf]
        %v447 = vld [vmem:[#allocation7 + $0x10] sm:$0xf]
        %v448 = vld [vmem:[#allocation7 + $0x14] sm:$0xf]
        %v449 = vld [vmem:[#allocation7 + $0x18] sm:$0xf]
        %v450 = vld [vmem:[#allocation7 + $0x1c] sm:$0xf]
        %v451 = vld [vmem:[#allocation7 + $0x20] sm:$0xf]
        %v452 = vld [vmem:[#allocation7 + $0x24] sm:$0xf]
        %v453 = vld [vmem:[#allocation7 + $0x28] sm:$0xf]
        %v454 = vld [vmem:[#allocation7 + $0x2c] sm:$0xf]
        %v455 = vld [vmem:[#allocation7 + $0x30] sm:$0xf]
        %v456 = vld [vmem:[#allocation7 + $0x34] sm:$0xf]
        %v457 = vld [vmem:[#allocation7 + $0x38] sm:$0xf]
        %v458 = vld [vmem:[#allocation7 + $0x3c] sm:$0xf]
        %v459 = vld [vmem:[%s5] sm:$0x1]
        %v461 = vlaneseq
        %v462 = vshrl.u32 %v461, 7
        %v463 = vsub.s32 0, %v462
        %v464 = vrot.slane %v459, %v463
        %v482 = vunpack.c.l.b16 %v443
        %v483 = vunpack.c.l.b16 %v444
        %v484 = vunpack.c.l.b16 %v445
        %v485 = vunpack.c.l.b16 %v446
        %v486 = vunpack.c.l.b16 %v447
        %v487 = vunpack.c.l.b16 %v448
        %v488 = vunpack.c.l.b16 %v449
        %v489 = vunpack.c.l.b16 %v450
        %v490 = vunpack.c.l.b16 %v451
        %v491 = vunpack.c.l.b16 %v452
        %v492 = vunpack.c.l.b16 %v453
        %v493 = vunpack.c.l.b16 %v454
        %v494 = vunpack.c.l.b16 %v455
        %v495 = vunpack.c.l.b16 %v456
        %v496 = vunpack.c.l.b16 %v457
        %v497 = vunpack.c.l.b16 %v458
        %v498 = vpack.c.b16 %v483, %v482
        %v499 = vpack.c.b16 %v485, %v484
        %v500 = vpack.c.b16 %v487, %v486
        %v501 = vpack.c.b16 %v489, %v488
        %v502 = vpack.c.b16 %v491, %v490
        %v503 = vpack.c.b16 %v493, %v492
        %v504 = vpack.c.b16 %v495, %v494
        %v505 = vpack.c.b16 %v497, %v496
        %514 = vmatprep.subr.bf16.mxu0 0
        %515 = vmatpush1.bf16.msra.mxu0 %v505
        %516 = vmatprep.subr.bf16.mxu0 0
        %517 = vmatpush1.bf16.msra.mxu0 %v504
        %518 = vmatprep.subr.bf16.mxu0 0
        %519 = vmatpush1.bf16.msra.mxu0 %v503
        %520 = vmatprep.subr.bf16.mxu0 0
        %521 = vmatpush1.bf16.msra.mxu0 %v502
        %522 = vmatprep.subr.bf16.mxu0 0
        %523 = vmatpush1.bf16.msra.mxu0 %v501
        %524 = vmatprep.subr.bf16.mxu0 0
        %525 = vmatpush1.bf16.msra.mxu0 %v500
        %526 = vmatprep.subr.bf16.mxu0 0
        %527 = vmatpush1.bf16.msra.mxu0 %v499
        %528 = vmatprep.subr.bf16.mxu0 0
        %529 = vmatpush1.bf16.msra.mxu0 %v498
        %530 = vmatprep.subr.bf16.mxu0 0
        %531 = vmatpush2.bf16.msra.mxu0 0
        %532 = vmatprep.subr.bf16.mxu0 0
        %533 = vmatpush2.bf16.msra.mxu0 0
        %534 = vmatprep.subr.bf16.mxu0 0
        %535 = vmatpush2.bf16.msra.mxu0 0
        %536 = vmatprep.subr.bf16.mxu0 0
        %537 = vmatpush2.bf16.msra.mxu0 0
        %538 = vmatprep.subr.bf16.mxu0 0
        %539 = vmatpush2.bf16.msra.mxu0 0
        %540 = vmatprep.subr.bf16.mxu0 0
        %541 = vmatpush2.bf16.msra.mxu0 0
        %542 = vmatprep.subr.bf16.mxu0 0
        %543 = vmatpush2.bf16.msra.mxu0 0
        %544 = vmatprep.subr.bf16.mxu0 0
        %545 = vmatpush2.bf16.msra.mxu0 0
        %546 = vmatprep.mubr.bf16.mxu0 0
        %547 = vmatmul.mubr.bf16.gmra.mxu0 %v442
        %v548 = vpop.f32.mrf.mxu0
        %v549 = vadd.f32 %v464, %v548
        %v550 = vpop.f32.mrf.mxu0
        %v551 = vpop.f32.mrf.mxu0
        %v552 = vpop.f32.mrf.mxu0
        %553 = vdwg.mxu0
        %v554 = vtanh.pop %v549
        %555 = vst [vmem:[%s295] sm:$0xff] %v554
        %s556 = sand.u32 %s163, 1
        %s557 = scalar_lea.sflag [#allocation4], %s556
        %s558 = sand.u32 %s163, 1
        %s559 = smul.addr %s558, 8
        %s560 = scalar_lea.vmem [#allocation8], %s559
        // Predicated region
        $region57: #{tpu_custom_call.1} parent=43 // pred_check
          %p561 = pneg %p173
        $region58: #{tpu_custom_call.1} parent=43 // pred_check_branch
          %563 = sbr.rel (%p561) target = $region60
        $region59: #{tpu_custom_call.1} parent=43 // pred_region
          %s565 = ssub.s32 128, 128
          %566 = vsyncadd %s557, %s565
          %s567 = smul.addr %s24, 128
          %s568 = scalar_lea.hbm %s6, %s567
          %s570 = sshll.u32 %s560, 4
          %s571 = int_to_ptr.vmem [resolvable:$true] %s570
          %573 = dma.vmem_to_hbm [thread:$0]  %s571, 128, %s568, %s557
        $region60: #{tpu_custom_call.1} parent=43 // pred_fallthru
          _
      $region44: #{tpu_custom_call.1} parent=5 // pred_fallthru
        _
      %p574 = scmp.le.s32.totalorder 2, %s19
      // Predicated region
      $region61: #{tpu_custom_call.1} parent=5 // pred_check
        %p575 = pneg %p574
      $region62: #{tpu_custom_call.1} parent=5 // pred_check_branch
        %577 = sbr.rel (%p575) target = $region64
      $region63: #{tpu_custom_call.1} parent=5 // pred_region
        %s578 = ssub.s32 %s19, 2
        // Predicated region
        $region65: #{tpu_custom_call.1} parent=63 // pred_check
          %p579 = pneg %p179
        $region66: #{tpu_custom_call.1} parent=63 // pred_check_branch
          %581 = sbr.rel (%p579) target = $region68
        $region67: #{tpu_custom_call.1} parent=63 // pred_region
          %s582 = sand.u32 %s164, 1
          %s583 = scalar_lea.sflag [#allocation4], %s582
          %s584 = sand.u32 %s164, 1
          %s585 = smul.addr %s584, 8
          %s586 = scalar_lea.vmem [#allocation8], %s585
          %587 = dma.done %s583, 128
        $region68: #{tpu_custom_call.1} parent=63 // pred_fallthru
          _
      $region64: #{tpu_custom_call.1} parent=5 // pred_fallthru
        _
    $region6: #{tpu_custom_call.1} parent=1 // loop_footer
      %s23 = sadd.s32 1, %s19
    $region7: #{tpu_custom_call.1} parent=1 // loop_footer_branch
      %18 = sbr.rel target = $region3
    $region8: #{tpu_custom_call.1} parent=1 // loop_exit
      _
    %588 = vsyncpa [#allocation3], 1
    %s589 = scalar_lea.sflag [#allocation3], 1
    %590 = vsyncpa %s589, 1
    %591 = vsyncpa [#allocation6], 1
    %592 = vsyncpa [#allocation4], 1
    %s593 = scalar_lea.sflag [#allocation4], 1
    %594 = vsyncpa %s593, 1

</llo_original>
